<compile_context>
chip_gen: v6e
topology: v6e:2x2x1
jax: 0.10.0
libtpu: 0.0.40
codegen_flags: <defaults>
</compile_context>

<pallas_src>
import functools

import jax
import jax.numpy as jnp
from jax.experimental import pallas as pl
from jax.experimental.pallas import tpu as pltpu

_LANE = 128
_SUB = 8
_ROW_ALIGN = 32          # min block-rows; keeps tiles legal for bf16/int8/bool inputs too
_EPS = 1e-7
_SMOOTH = 0.0
_NSPLIT = 2              # leading "parallel" grid axis (2 TCs on v7x; harmless on v5e/v6e)
_MAX_BLOCK_ROWS = 4096   # (4096,128) f32 block = 2 MiB; 2 inputs x 2 bufs = 8 MiB VMEM


def _double_sigmoid(x):
    # sigmoid(sigmoid(x)) in tanh form: sigmoid(z) = 0.5*tanh(0.5*z) + 0.5.
    # One EUP op per sigmoid (instead of exp + reciprocal) halves EUP-slot pressure,
    # which matters on v7x where HBM bandwidth would otherwise outrun the single EUP.
    p = 0.5 * jnp.tanh(0.5 * x) + 0.5
    return 0.5 * jnp.tanh(0.5 * p) + 0.5


def _round_up(v, m):
    return ((v + m - 1) // m) * m


def _dice_partial_kernel(x_ref, t_ref, inter_ref, psum_ref, tsum_ref, *,
                         block_rows, blocks_per_split, full_rows):
    s = pl.program_id(0)   # parallel split
    j = pl.program_id(1)   # sequential block within the split

    @pl.when(j == 0)
    def _():
        inter_ref[...] = jnp.zeros_like(inter_ref)
        psum_ref[...] = jnp.zeros_like(psum_ref)
        tsum_ref[...] = jnp.zeros_like(tsum_ref)

    start_row = (s * blocks_per_split + j) * block_rows
    # Only blocks that stick past the real rows need masking: the (single) partial
    # trailing block and clamped overhang blocks. Interior blocks take the fast path.
    needs_mask = start_row + block_rows > full_rows

    shape3 = (block_rows // _SUB, _SUB, _LANE)

    def _accumulate(p, t):
        # Reduce only the block-rows axis down to 8 sublanes (vreg-wise VPU adds);
        # the cross-lane/sublane reduce happens once, outside the kernel.
        inter_ref[...] += jnp.sum((p * t).reshape(shape3), axis=0)
        psum_ref[...] += jnp.sum(p.reshape(shape3), axis=0)
        tsum_ref[...] += jnp.sum(t.reshape(shape3), axis=0)

    @pl.when(jnp.logical_not(needs_mask))
    def _():
        x = x_ref[...].astype(jnp.float32)
        t = t_ref[...].astype(jnp.float32)
        _accumulate(_double_sigmoid(x), t)

    @pl.when(needs_mask)
    def _():
        row_ids = start_row + jax.lax.broadcasted_iota(
            jnp.int32, (block_rows, _LANE), 0)
        valid = row_ids < full_rows
        x = x_ref[...].astype(jnp.float32)
        t = jnp.where(valid, t_ref[...].astype(jnp.float32), 0.0)
        p = jnp.where(valid, _double_sigmoid(x), 0.0)
        _accumulate(p, t)


def dice_loss(x, target):
    """x: logits (any shape, e.g. NCHW), target: binary mask (same shape). Scalar f32."""
    assert x.shape == target.shape
    n = x.size                      # static
    full_rows = n // _LANE
    rem = n % _LANE

    xf = x.reshape(-1)
    tf = target.reshape(-1)

    # <128-element lane tail handled in plain JAX: avoids an O(n) jnp.pad read+write
    # of both inputs on a memory-bound kernel.
    if rem:
        x_tail = xf[full_rows * _LANE:].astype(jnp.float32)
        t_tail = tf[full_rows * _LANE:].astype(jnp.float32)
        p_tail = _double_sigmoid(x_tail)
        tail_inter = jnp.sum(p_tail * t_tail)
        tail_psum = jnp.sum(p_tail)
        tail_tsum = jnp.sum(t_tail)
    else:
        tail_inter = tail_psum = tail_tsum = jnp.float32(0.0)

    if full_rows == 0:
        inter, psum, tsum = tail_inter, tail_psum, tail_tsum
    else:
        x2 = xf[: full_rows * _LANE].reshape(full_rows, _LANE)
        t2 = tf[: full_rows * _LANE].reshape(full_rows, _LANE)

        block_rows = min(_MAX_BLOCK_ROWS, _round_up(full_rows, _ROW_ALIGN))
        # keep the two parallel splits balanced to within one block
        if full_rows > _ROW_ALIGN * _NSPLIT:
            block_rows = min(block_rows,
                             _round_up(pl.cdiv(full_rows, _NSPLIT), _ROW_ALIGN))
        total_blocks = pl.cdiv(full_rows, block_rows)
        bps = pl.cdiv(total_blocks, _NSPLIT)      # blocks per split

        def in_map(s, j):
            # clamp overhang grid steps onto the last real block; their contribution
            # is fully masked in-kernel, so they only cost one redundant DMA
            return (jnp.minimum(s * bps + j, total_blocks - 1), 0)

        in_spec = pl.BlockSpec((block_rows, _LANE), in_map)
        acc_spec = pl.BlockSpec((None, _SUB, _LANE), lambda s, j: (s, 0, 0))
        acc_shape = jax.ShapeDtypeStruct((_NSPLIT, _SUB, _LANE), jnp.float32)

        kernel = functools.partial(
            _dice_partial_kernel,
            block_rows=block_rows, blocks_per_split=bps, full_rows=full_rows)

        inter_p, psum_p, tsum_p = pl.pallas_call(
            kernel,
            out_shape=(acc_shape, acc_shape, acc_shape),
            grid_spec=pltpu.PrefetchScalarGridSpec(
                num_scalar_prefetch=0,
                grid=(_NSPLIT, bps),
                in_specs=[in_spec, in_spec],
                out_specs=[acc_spec, acc_spec, acc_spec],
            ),
            compiler_params=pltpu.CompilerParams(
                dimension_semantics=("parallel", "arbitrary"),
                vmem_limit_bytes=32 * 1024 * 1024),
        )(x2, t2)

        # Tiny cross-split / cross-lane combine (3 x (2,8,128) f32) done in JAX.
        inter = jnp.sum(inter_p) + tail_inter
        psum = jnp.sum(psum_p) + tail_psum
        tsum = jnp.sum(tsum_p) + tail_tsum

    card = psum + tsum
    dice = (2.0 * inter + _SMOOTH) / jnp.maximum(card + _SMOOTH, _EPS)
    loss = (1.0 - dice) * (tsum > 0.0).astype(jnp.float32)
    return loss


if __name__ == "__main__":
    key = jax.random.PRNGKey(0)
    k1, k2, k3, k4 = jax.random.split(key, 4)

    def ref_loss(xr, tr):
        # pure-JAX reference of the same semantics (module sigmoid + SMP sigmoid)
        p = jax.nn.sigmoid(jax.nn.sigmoid(xr))
        inter = jnp.sum(p * tr)
        card = jnp.sum(p) + jnp.sum(tr)
        d = (2.0 * inter + _SMOOTH) / jnp.maximum(card + _SMOOTH, _EPS)
        return (1.0 - d) * (jnp.sum(tr) > 0).astype(jnp.float32)

    # NCHW logits and binary target (batch=2, channels=1, spatial=32) — lane-aligned size
    x = jax.random.normal(k1, (2, 1, 32, 32), dtype=jnp.float32)
    target = (jax.random.uniform(k2, (2, 1, 32, 32)) > 0.5).astype(jnp.float32)
    loss = jax.jit(dice_loss)(x, target)
    jax.block_until_ready(loss)
    assert jnp.allclose(loss, ref_loss(x, target), atol=1e-5), (loss, ref_loss(x, target))

    # ragged size exercising the lane-tail path handled outside the kernel
    x_r = jax.random.normal(k3, (2, 1, 30, 31), dtype=jnp.float32)
    t_r = (jax.random.uniform(k4, (2, 1, 30, 31)) > 0.5).astype(jnp.float32)
    loss_r = jax.jit(dice_loss)(x_r, t_r)
    jax.block_until_ready(loss_r)
    assert jnp.allclose(loss_r, ref_loss(x_r, t_r), atol=1e-5), (loss_r, ref_loss(x_r, t_r))

    print("KERNEL_OK")
</pallas_src>

<mosaic_0001>
module attributes {stable_mosaic.version = 11 : i64} {
  func.func @_dice_partial_kernel(%arg0: i32, %arg1: i32, %arg2: memref<32x128xf32, #tpu.memory_space<vmem>>, %arg3: memref<32x128xf32, #tpu.memory_space<vmem>>, %arg4: memref<1x8x128xf32, #tpu.memory_space<vmem>>, %arg5: memref<1x8x128xf32, #tpu.memory_space<vmem>>, %arg6: memref<1x8x128xf32, #tpu.memory_space<vmem>>) attributes {dimension_semantics = [#tpu.dimension_semantics<parallel>, #tpu.dimension_semantics<arbitrary>], iteration_bounds = array<i64: 2, 1>, scalar_prefetch = 0 : i64, scratch_operands = 0 : i64, tpu.core_type = #tpu.core_type<tc>, window_params = [{transform_indices = @transform_0, window_bounds = array<i64: 32, 128>}, {transform_indices = @transform_1, window_bounds = array<i64: 32, 128>}, {transform_indices = @transform_2, window_bounds = array<i64: 1, 8, 128>}, {transform_indices = @transform_3, window_bounds = array<i64: 1, 8, 128>}, {transform_indices = @transform_4, window_bounds = array<i64: 1, 8, 128>}]} {
    %c0_i32 = arith.constant 0 : i32
    %0 = arith.cmpi eq, %arg1, %c0_i32 : i32
    %1 = arith.extui %0 : i1 to i32
    %c0_i32_0 = arith.constant 0 : i32
    %2 = arith.cmpi ne, %1, %c0_i32_0 : i32
    scf.if %2 {
      %cst = arith.constant 0.000000e+00 : f32
      %13 = vector.broadcast %cst : f32 to vector<8x128xf32>
      %c0 = arith.constant 0 : index
      %c0_4 = arith.constant 0 : index
      %c0_5 = arith.constant 0 : index
      %14 = vector.load %arg4[%c0, %c0_4, %c0_5] : memref<1x8x128xf32, #tpu.memory_space<vmem>>, vector<1x8x128xf32>
      %15 = vector.shape_cast %14 : vector<1x8x128xf32> to vector<8x128xf32>
      %16 = vector.shape_cast %13 : vector<8x128xf32> to vector<1x8x128xf32>
      tpu.vector_store %arg4[%c0, %c0_4, %c0_5], %16 {strides = array<i32>} : memref<1x8x128xf32, #tpu.memory_space<vmem>>, vector<1x8x128xf32>,
      %cst_6 = arith.constant 0.000000e+00 : f32
      %17 = vector.broadcast %cst_6 : f32 to vector<8x128xf32>
      %c0_7 = arith.constant 0 : index
      %c0_8 = arith.constant 0 : index
      %c0_9 = arith.constant 0 : index
      %18 = vector.load %arg5[%c0_7, %c0_8, %c0_9] : memref<1x8x128xf32, #tpu.memory_space<vmem>>, vector<1x8x128xf32>
      %19 = vector.shape_cast %18 : vector<1x8x128xf32> to vector<8x128xf32>
      %20 = vector.shape_cast %17 : vector<8x128xf32> to vector<1x8x128xf32>
      tpu.vector_store %arg5[%c0_7, %c0_8, %c0_9], %20 {strides = array<i32>} : memref<1x8x128xf32, #tpu.memory_space<vmem>>, vector<1x8x128xf32>,
      %cst_10 = arith.constant 0.000000e+00 : f32
      %21 = vector.broadcast %cst_10 : f32 to vector<8x128xf32>
      %c0_11 = arith.constant 0 : index
      %c0_12 = arith.constant 0 : index
      %c0_13 = arith.constant 0 : index
      %22 = vector.load %arg6[%c0_11, %c0_12, %c0_13] : memref<1x8x128xf32, #tpu.memory_space<vmem>>, vector<1x8x128xf32>
      %23 = vector.shape_cast %22 : vector<1x8x128xf32> to vector<8x128xf32>
      %24 = vector.shape_cast %21 : vector<8x128xf32> to vector<1x8x128xf32>
      tpu.vector_store %arg6[%c0_11, %c0_12, %c0_13], %24 {strides = array<i32>} : memref<1x8x128xf32, #tpu.memory_space<vmem>>, vector<1x8x128xf32>,
    } else {
    }
    %c1_i32 = arith.constant 1 : i32
    %3 = arith.muli %arg0, %c1_i32 : i32
    %4 = arith.addi %3, %arg1 : i32
    %c32_i32 = arith.constant 32 : i32
    %5 = arith.muli %4, %c32_i32 : i32
    %c32_i32_1 = arith.constant 32 : i32
    %6 = arith.addi %5, %c32_i32_1 : i32
    %c16_i32 = arith.constant 16 : i32
    %7 = arith.cmpi sgt, %6, %c16_i32 : i32
    %true = arith.constant true
    %8 = arith.xori %7, %true : i1
    %9 = arith.extui %8 : i1 to i32
    %c0_i32_2 = arith.constant 0 : i32
    %10 = arith.cmpi ne, %9, %c0_i32_2 : i32
    scf.if %10 {
      %c0 = arith.constant 0 : index
      %c0_4 = arith.constant 0 : index
      %13 = vector.load %arg2[%c0, %c0_4] : memref<32x128xf32, #tpu.memory_space<vmem>>, vector<32x128xf32>
      %c0_5 = arith.constant 0 : index
      %c0_6 = arith.constant 0 : index
      %14 = vector.load %arg3[%c0_5, %c0_6] : memref<32x128xf32, #tpu.memory_space<vmem>>, vector<32x128xf32>
      %cst = arith.constant 5.000000e-01 : f32
      %15 = vector.broadcast %cst : f32 to vector<32x128xf32>
      %16 = arith.mulf %15, %13 : vector<32x128xf32>
      %17 = math.tanh %16 : vector<32x128xf32>
      %cst_7 = arith.constant 5.000000e-01 : f32
      %18 = vector.broadcast %cst_7 : f32 to vector<32x128xf32>
      %19 = arith.mulf %18, %17 : vector<32x128xf32>
      %cst_8 = arith.constant 5.000000e-01 : f32
      %20 = vector.broadcast %cst_8 : f32 to vector<32x128xf32>
      %21 = arith.addf %19, %20 : vector<32x128xf32>
      %cst_9 = arith.constant 5.000000e-01 : f32
      %22 = vector.broadcast %cst_9 : f32 to vector<32x128xf32>
      %23 = arith.mulf %22, %21 : vector<32x128xf32>
      %24 = math.tanh %23 : vector<32x128xf32>
      %cst_10 = arith.constant 5.000000e-01 : f32
      %25 = vector.broadcast %cst_10 : f32 to vector<32x128xf32>
      %26 = arith.mulf %25, %24 : vector<32x128xf32>
      %cst_11 = arith.constant 5.000000e-01 : f32
      %27 = vector.broadcast %cst_11 : f32 to vector<32x128xf32>
      %28 = arith.addf %26, %27 : vector<32x128xf32>
      %c0_12 = arith.constant 0 : index
      %c0_13 = arith.constant 0 : index
      %c0_14 = arith.constant 0 : index
      %29 = vector.load %arg4[%c0_12, %c0_13, %c0_14] : memref<1x8x128xf32, #tpu.memory_space<vmem>>, vector<1x8x128xf32>
      %30 = vector.shape_cast %29 : vector<1x8x128xf32> to vector<8x128xf32>
      %31 = arith.mulf %28, %14 : vector<32x128xf32>
      %32 = vector.shape_cast %31 : vector<32x128xf32> to vector<4x8x128xf32>
      %cst_15 = arith.constant dense<0.000000e+00> : vector<8x128xf32>
      %33 = vector.multi_reduction <add>, %32, %cst_15 [0] : vector<4x8x128xf32> to vector<8x128xf32>
      %34 = arith.addf %30, %33 : vector<8x128xf32>
      %c0_16 = arith.constant 0 : index
      %c0_17 = arith.constant 0 : index
      %c0_18 = arith.constant 0 : index
      %35 = vector.load %arg4[%c0_16, %c0_17, %c0_18] : memref<1x8x128xf32, #tpu.memory_space<vmem>>, vector<1x8x128xf32>
      %36 = vector.shape_cast %35 : vector<1x8x128xf32> to vector<8x128xf32>
      %37 = vector.shape_cast %34 : vector<8x128xf32> to vector<1x8x128xf32>
      tpu.vector_store %arg4[%c0_16, %c0_17, %c0_18], %37 {strides = array<i32>} : memref<1x8x128xf32, #tpu.memory_space<vmem>>, vector<1x8x128xf32>,
      %c0_19 = arith.constant 0 : index
      %c0_20 = arith.constant 0 : index
      %c0_21 = arith.constant 0 : index
      %38 = vector.load %arg5[%c0_19, %c0_20, %c0_21] : memref<1x8x128xf32, #tpu.memory_space<vmem>>, vector<1x8x128xf32>
      %39 = vector.shape_cast %38 : vector<1x8x128xf32> to vector<8x128xf32>
      %40 = vector.shape_cast %28 : vector<32x128xf32> to vector<4x8x128xf32>
      %cst_22 = arith.constant dense<0.000000e+00> : vector<8x128xf32>
      %41 = vector.multi_reduction <add>, %40, %cst_22 [0] : vector<4x8x128xf32> to vector<8x128xf32>
      %42 = arith.addf %39, %41 : vector<8x128xf32>
      %c0_23 = arith.constant 0 : index
      %c0_24 = arith.constant 0 : index
      %c0_25 = arith.constant 0 : index
      %43 = vector.load %arg5[%c0_23, %c0_24, %c0_25] : memref<1x8x128xf32, #tpu.memory_space<vmem>>, vector<1x8x128xf32>
      %44 = vector.shape_cast %43 : vector<1x8x128xf32> to vector<8x128xf32>
      %45 = vector.shape_cast %42 : vector<8x128xf32> to vector<1x8x128xf32>
      tpu.vector_store %arg5[%c0_23, %c0_24, %c0_25], %45 {strides = array<i32>} : memref<1x8x128xf32, #tpu.memory_space<vmem>>, vector<1x8x128xf32>,
      %c0_26 = arith.constant 0 : index
      %c0_27 = arith.constant 0 : index
      %c0_28 = arith.constant 0 : index
      %46 = vector.load %arg6[%c0_26, %c0_27, %c0_28] : memref<1x8x128xf32, #tpu.memory_space<vmem>>, vector<1x8x128xf32>
      %47 = vector.shape_cast %46 : vector<1x8x128xf32> to vector<8x128xf32>
      %48 = vector.shape_cast %14 : vector<32x128xf32> to vector<4x8x128xf32>
      %cst_29 = arith.constant dense<0.000000e+00> : vector<8x128xf32>
      %49 = vector.multi_reduction <add>, %48, %cst_29 [0] : vector<4x8x128xf32> to vector<8x128xf32>
      %50 = arith.addf %47, %49 : vector<8x128xf32>
      %c0_30 = arith.constant 0 : index
      %c0_31 = arith.constant 0 : index
      %c0_32 = arith.constant 0 : index
      %51 = vector.load %arg6[%c0_30, %c0_31, %c0_32] : memref<1x8x128xf32, #tpu.memory_space<vmem>>, vector<1x8x128xf32>
      %52 = vector.shape_cast %51 : vector<1x8x128xf32> to vector<8x128xf32>
      %53 = vector.shape_cast %50 : vector<8x128xf32> to vector<1x8x128xf32>
      tpu.vector_store %arg6[%c0_30, %c0_31, %c0_32], %53 {strides = array<i32>} : memref<1x8x128xf32, #tpu.memory_space<vmem>>, vector<1x8x128xf32>,
    } else {
    }
    %11 = arith.extui %7 : i1 to i32
    %c0_i32_3 = arith.constant 0 : i32
    %12 = arith.cmpi ne, %11, %c0_i32_3 : i32
    scf.if %12 {
      %13 = tpu.iota {dimensions = array<i32: 0>} : vector<32x128xi32>
      %14 = vector.broadcast %5 : i32 to vector<32x128xi32>
      %15 = arith.addi %14, %13 : vector<32x128xi32>
      %c16_i32_4 = arith.constant 16 : i32
      %16 = vector.broadcast %c16_i32_4 : i32 to vector<32x128xi32>
      %17 = arith.cmpi slt, %15, %16 : vector<32x128xi32>
      %c0 = arith.constant 0 : index
      %c0_5 = arith.constant 0 : index
      %18 = vector.load %arg2[%c0, %c0_5] : memref<32x128xf32, #tpu.memory_space<vmem>>, vector<32x128xf32>
      %c0_6 = arith.constant 0 : index
      %c0_7 = arith.constant 0 : index
      %19 = vector.load %arg3[%c0_6, %c0_7] : memref<32x128xf32, #tpu.memory_space<vmem>>, vector<32x128xf32>
      %cst = arith.constant 0.000000e+00 : f32
      %20 = vector.broadcast %cst : f32 to vector<32x128xf32>
      %21 = arith.select %17, %19, %20 : vector<32x128xi1>, vector<32x128xf32>
      %cst_8 = arith.constant 5.000000e-01 : f32
      %22 = vector.broadcast %cst_8 : f32 to vector<32x128xf32>
      %23 = arith.mulf %22, %18 : vector<32x128xf32>
      %24 = math.tanh %23 : vector<32x128xf32>
      %cst_9 = arith.constant 5.000000e-01 : f32
      %25 = vector.broadcast %cst_9 : f32 to vector<32x128xf32>
      %26 = arith.mulf %25, %24 : vector<32x128xf32>
      %cst_10 = arith.constant 5.000000e-01 : f32
      %27 = vector.broadcast %cst_10 : f32 to vector<32x128xf32>
      %28 = arith.addf %26, %27 : vector<32x128xf32>
      %cst_11 = arith.constant 5.000000e-01 : f32
      %29 = vector.broadcast %cst_11 : f32 to vector<32x128xf32>
      %30 = arith.mulf %29, %28 : vector<32x128xf32>
      %31 = math.tanh %30 : vector<32x128xf32>
      %cst_12 = arith.constant 5.000000e-01 : f32
      %32 = vector.broadcast %cst_12 : f32 to vector<32x128xf32>
      %33 = arith.mulf %32, %31 : vector<32x128xf32>
      %cst_13 = arith.constant 5.000000e-01 : f32
      %34 = vector.broadcast %cst_13 : f32 to vector<32x128xf32>
      %35 = arith.addf %33, %34 : vector<32x128xf32>
      %cst_14 = arith.constant 0.000000e+00 : f32
      %36 = vector.broadcast %cst_14 : f32 to vector<32x128xf32>
      %37 = arith.select %17, %35, %36 : vector<32x128xi1>, vector<32x128xf32>
      %c0_15 = arith.constant 0 : index
      %c0_16 = arith.constant 0 : index
      %c0_17 = arith.constant 0 : index
      %38 = vector.load %arg4[%c0_15, %c0_16, %c0_17] : memref<1x8x128xf32, #tpu.memory_space<vmem>>, vector<1x8x128xf32>
      %39 = vector.shape_cast %38 : vector<1x8x128xf32> to vector<8x128xf32>
      %40 = arith.mulf %37, %21 : vector<32x128xf32>
      %41 = vector.shape_cast %40 : vector<32x128xf32> to vector<4x8x128xf32>
      %cst_18 = arith.constant dense<0.000000e+00> : vector<8x128xf32>
      %42 = vector.multi_reduction <add>, %41, %cst_18 [0] : vector<4x8x128xf32> to vector<8x128xf32>
      %43 = arith.addf %39, %42 : vector<8x128xf32>
      %c0_19 = arith.constant 0 : index
      %c0_20 = arith.constant 0 : index
      %c0_21 = arith.constant 0 : index
      %44 = vector.load %arg4[%c0_19, %c0_20, %c0_21] : memref<1x8x128xf32, #tpu.memory_space<vmem>>, vector<1x8x128xf32>
      %45 = vector.shape_cast %44 : vector<1x8x128xf32> to vector<8x128xf32>
      %46 = vector.shape_cast %43 : vector<8x128xf32> to vector<1x8x128xf32>
      tpu.vector_store %arg4[%c0_19, %c0_20, %c0_21], %46 {strides = array<i32>} : memref<1x8x128xf32, #tpu.memory_space<vmem>>, vector<1x8x128xf32>,
      %c0_22 = arith.constant 0 : index
      %c0_23 = arith.constant 0 : index
      %c0_24 = arith.constant 0 : index
      %47 = vector.load %arg5[%c0_22, %c0_23, %c0_24] : memref<1x8x128xf32, #tpu.memory_space<vmem>>, vector<1x8x128xf32>
      %48 = vector.shape_cast %47 : vector<1x8x128xf32> to vector<8x128xf32>
      %49 = vector.shape_cast %37 : vector<32x128xf32> to vector<4x8x128xf32>
      %cst_25 = arith.constant dense<0.000000e+00> : vector<8x128xf32>
      %50 = vector.multi_reduction <add>, %49, %cst_25 [0] : vector<4x8x128xf32> to vector<8x128xf32>
      %51 = arith.addf %48, %50 : vector<8x128xf32>
      %c0_26 = arith.constant 0 : index
      %c0_27 = arith.constant 0 : index
      %c0_28 = arith.constant 0 : index
      %52 = vector.load %arg5[%c0_26, %c0_27, %c0_28] : memref<1x8x128xf32, #tpu.memory_space<vmem>>, vector<1x8x128xf32>
      %53 = vector.shape_cast %52 : vector<1x8x128xf32> to vector<8x128xf32>
      %54 = vector.shape_cast %51 : vector<8x128xf32> to vector<1x8x128xf32>
      tpu.vector_store %arg5[%c0_26, %c0_27, %c0_28], %54 {strides = array<i32>} : memref<1x8x128xf32, #tpu.memory_space<vmem>>, vector<1x8x128xf32>,
      %c0_29 = arith.constant 0 : index
      %c0_30 = arith.constant 0 : index
      %c0_31 = arith.constant 0 : index
      %55 = vector.load %arg6[%c0_29, %c0_30, %c0_31] : memref<1x8x128xf32, #tpu.memory_space<vmem>>, vector<1x8x128xf32>
      %56 = vector.shape_cast %55 : vector<1x8x128xf32> to vector<8x128xf32>
      %57 = vector.shape_cast %21 : vector<32x128xf32> to vector<4x8x128xf32>
      %cst_32 = arith.constant dense<0.000000e+00> : vector<8x128xf32>
      %58 = vector.multi_reduction <add>, %57, %cst_32 [0] : vector<4x8x128xf32> to vector<8x128xf32>
      %59 = arith.addf %56, %58 : vector<8x128xf32>
      %c0_33 = arith.constant 0 : index
      %c0_34 = arith.constant 0 : index
      %c0_35 = arith.constant 0 : index
      %60 = vector.load %arg6[%c0_33, %c0_34, %c0_35] : memref<1x8x128xf32, #tpu.memory_space<vmem>>, vector<1x8x128xf32>
      %61 = vector.shape_cast %60 : vector<1x8x128xf32> to vector<8x128xf32>
      %62 = vector.shape_cast %59 : vector<8x128xf32> to vector<1x8x128xf32>
      tpu.vector_store %arg6[%c0_33, %c0_34, %c0_35], %62 {strides = array<i32>} : memref<1x8x128xf32, #tpu.memory_space<vmem>>, vector<1x8x128xf32>,
    } else {
    }
    return
  }
  func.func @transform_0(%arg0: i32, %arg1: i32) -> (i32, i32) {
    %c1_i32 = arith.constant 1 : i32
    %0 = arith.muli %arg0, %c1_i32 : i32
    %1 = arith.addi %0, %arg1 : i32
    %c0_i32 = arith.constant 0 : i32
    %2 = arith.minsi %1, %c0_i32 : i32
    %c0_i32_0 = arith.constant 0 : i32
    %c0_i32_1 = arith.constant 0 : i32
    return %2, %c0_i32_0 : i32, i32
  }
  func.func @transform_1(%arg0: i32, %arg1: i32) -> (i32, i32) {
    %c1_i32 = arith.constant 1 : i32
    %0 = arith.muli %arg0, %c1_i32 : i32
    %1 = arith.addi %0, %arg1 : i32
    %c0_i32 = arith.constant 0 : i32
    %2 = arith.minsi %1, %c0_i32 : i32
    %c0_i32_0 = arith.constant 0 : i32
    %c0_i32_1 = arith.constant 0 : i32
    return %2, %c0_i32_0 : i32, i32
  }
  func.func @transform_2(%arg0: i32, %arg1: i32) -> (i32, i32, i32) {
    %c0_i32 = arith.constant 0 : i32
    %c0_i32_0 = arith.constant 0 : i32
    %c0_i32_1 = arith.constant 0 : i32
    return %arg0, %c0_i32, %c0_i32_0 : i32, i32, i32
  }
  func.func @transform_3(%arg0: i32, %arg1: i32) -> (i32, i32, i32) {
    %c0_i32 = arith.constant 0 : i32
    %c0_i32_0 = arith.constant 0 : i32
    %c0_i32_1 = arith.constant 0 : i32
    return %arg0, %c0_i32, %c0_i32_0 : i32, i32, i32
  }
  func.func @transform_4(%arg0: i32, %arg1: i32) -> (i32, i32, i32) {
    %c0_i32 = arith.constant 0 : i32
    %c0_i32_0 = arith.constant 0 : i32
    %c0_i32_1 = arith.constant 0 : i32
    return %arg0, %c0_i32, %c0_i32_0 : i32, i32, i32
  }
}

</mosaic_0001>

<llo_original>
// kernel: dice_loss.1
$region0: #{dice_loss.1}
  #allocation0 [shape = 'u32[]', space=smem, size = 0x4, offset = 0x4, fixed_abs, tag = 'smem constant byte address 0x4 - core index']
  #allocation1 [shape = 'u32[144,128]{1,0:T(1,128)}', space=vmem, size = 0x12000, scoped, tag = 'internal scratch']
  %s0 = inlined_call_operand.vmem [shape: f32[16,128], index: 0, kind: input, shape index: {}]
  %s1 = inlined_call_operand.vmem [shape: f32[16,128], index: 1, kind: input, shape index: {}]
  %s2 = inlined_call_operand.vmem [shape: f32[2,8,128], index: 2, kind: output, shape index: {0}]
  %s3 = inlined_call_operand.vmem [shape: f32[2,8,128], index: 3, kind: output, shape index: {1}]
  %s4 = inlined_call_operand.vmem [shape: f32[2,8,128], index: 4, kind: output, shape index: {2}]
  %5 = xla_tuple %s2, %s3, %s4
  %s6 = sld [smem:[#allocation0]]
  $region69: #{dice_loss.1} parent=0
    _
  %s8 = ssub.s32 1, %s6
  %s9 = scalar_select 0, %s8, %s6
  loop: start=0, step=1, limit=4
  $region2: #{dice_loss.1} parent=0 // loop_pre_header
    _
  $region3: #{dice_loss.1} parent=0 // loop_header
    %s11 = sphi 0, %s15
    %p12 = scmp.ge.s32.totalorder %s11, 4
    %s18 = sphi 0, %s30
    %s19 = sphi 0, %s26
    %s20 = sphi 0, %s18
    %s21 = sphi 0, %s19
    %s22 = sphi 0, %s20
    %s23 = sphi 0, %s21
    %s39 = sphi 0, %s41
    %s42 = sphi 0, %s39
    %s43 = sphi 0, %s42
    %s59 = sphi 0, %s43
    %s71 = sphi 0, %s73
    %s74 = sphi 0, %s71
    %s75 = sphi 0, %s74
    %s91 = sphi 0, %s75
    %s97 = sphi 0, %s99
    %s100 = sphi 0, %s97
    %s101 = sphi 0, %s100
    %s117 = sphi 0, %s101
    %s123 = sphi 0, %s125
    %s126 = sphi 0, %s123
    %s127 = sphi 0, %s126
    %s143 = sphi 0, %s127
    %s149 = sphi 0, %s151
    %s152 = sphi 0, %s149
    %s153 = sphi 0, %s152
    %s169 = sphi 0, %s153
  $region4: #{dice_loss.1} parent=0 // loop_header_branch
    %14 = sbr.rel (%p12) target = $region8
  $region5: #{dice_loss.1} parent=0 // loop_body
    %s16 = ssub.s32 %s11, 1
    %s17 = ssub.s32 %s11, 2
    %s24 = sadd.s32 1, %s19
    %p25 = scmp.ge.s32.totalorder %s24, 1
    %s26 = scalar_select %p25, 0, %s24
    %s27 = sadd.s32 1, %s18
    %s28 = scalar_select %p25, %s27, %s18
    %p29 = scmp.ge.s32.totalorder %s28, 2
    %s30 = scalar_select %p29, 0, %s28
    %s31 = sadd.s32 %s18, %s19
    %p32 = scmp.lt.s32.totalorder %s31, 0
    %s33 = scalar_select %p32, %s31, 0
    %s34 = sadd.s32 %s30, %s26
    %p35 = scmp.lt.s32.totalorder %s34, 0
    %s36 = scalar_select %p35, %s34, 0
    %s37 = ssub.s32 %s33, %s36
    %p38 = scmp.eq.s32.totalorder %s37, 0
    %s40 = sadd.s32 %s39, 1
    %s41 = scalar_select %p38, %s39, %s40
    %p44 = pneg %p38
    %p45 = scmp.eq.s32.totalorder %s11, 1
    %p46 = por %p44, %p45
    %p47 = scmp.ne.s32.totalorder %s39, %s42
    %p48 = scmp.eq.s32.totalorder %s11, 0
    %p49 = por %p47, %p48
    %p50 = scmp.ne.s32.totalorder %s39, %s42
    %p51 = scmp.eq.s32.totalorder %s16, 1
    %p52 = por %p50, %p51
    %p53 = scmp.ne.s32.totalorder %s42, %s43
    %p54 = scmp.eq.s32.totalorder %s16, 0
    %p55 = por %p53, %p54
    %p56 = scmp.ne.s32.totalorder %s42, %s43
    %p57 = scmp.eq.s32.totalorder %s17, 1
    %p58 = por %p56, %p57
    %p60 = scmp.ne.s32.totalorder %s43, %s59
    %p61 = scmp.eq.s32.totalorder %s17, 0
    %p62 = por %p60, %p61
    %s63 = sadd.s32 %s18, %s19
    %p64 = scmp.lt.s32.totalorder %s63, 0
    %s65 = scalar_select %p64, %s63, 0
    %s66 = sadd.s32 %s30, %s26
    %p67 = scmp.lt.s32.totalorder %s66, 0
    %s68 = scalar_select %p67, %s66, 0
    %s69 = ssub.s32 %s65, %s68
    %p70 = scmp.eq.s32.totalorder %s69, 0
    %s72 = sadd.s32 %s71, 1
    %s73 = scalar_select %p70, %s71, %s72
    %p76 = pneg %p70
    %p77 = scmp.eq.s32.totalorder %s11, 1
    %p78 = por %p76, %p77
    %p79 = scmp.ne.s32.totalorder %s71, %s74
    %p80 = scmp.eq.s32.totalorder %s11, 0
    %p81 = por %p79, %p80
    %p82 = scmp.ne.s32.totalorder %s71, %s74
    %p83 = scmp.eq.s32.totalorder %s16, 1
    %p84 = por %p82, %p83
    %p85 = scmp.ne.s32.totalorder %s74, %s75
    %p86 = scmp.eq.s32.totalorder %s16, 0
    %p87 = por %p85, %p86
    %p88 = scmp.ne.s32.totalorder %s74, %s75
    %p89 = scmp.eq.s32.totalorder %s17, 1
    %p90 = por %p88, %p89
    %p92 = scmp.ne.s32.totalorder %s75, %s91
    %p93 = scmp.eq.s32.totalorder %s17, 0
    %p94 = por %p92, %p93
    %s95 = ssub.s32 %s18, %s30
    %p96 = scmp.eq.s32.totalorder %s95, 0
    %s98 = sadd.s32 %s97, 1
    %s99 = scalar_select %p96, %s97, %s98
    %p102 = pneg %p96
    %p103 = scmp.eq.s32.totalorder %s11, 1
    %p104 = por %p102, %p103
    %p105 = scmp.ne.s32.totalorder %s97, %s100
    %p106 = scmp.eq.s32.totalorder %s11, 0
    %p107 = por %p105, %p106
    %p108 = scmp.ne.s32.totalorder %s97, %s100
    %p109 = scmp.eq.s32.totalorder %s16, 1
    %p110 = por %p108, %p109
    %p111 = scmp.ne.s32.totalorder %s100, %s101
    %p112 = scmp.eq.s32.totalorder %s16, 0
    %p113 = por %p111, %p112
    %p114 = scmp.ne.s32.totalorder %s100, %s101
    %p115 = scmp.eq.s32.totalorder %s17, 1
    %p116 = por %p114, %p115
    %p118 = scmp.ne.s32.totalorder %s101, %s117
    %p119 = scmp.eq.s32.totalorder %s17, 0
    %p120 = por %p118, %p119
    %s121 = ssub.s32 %s18, %s30
    %p122 = scmp.eq.s32.totalorder %s121, 0
    %s124 = sadd.s32 %s123, 1
    %s125 = scalar_select %p122, %s123, %s124
    %p128 = pneg %p122
    %p129 = scmp.eq.s32.totalorder %s11, 1
    %p130 = por %p128, %p129
    %p131 = scmp.ne.s32.totalorder %s123, %s126
    %p132 = scmp.eq.s32.totalorder %s11, 0
    %p133 = por %p131, %p132
    %p134 = scmp.ne.s32.totalorder %s123, %s126
    %p135 = scmp.eq.s32.totalorder %s16, 1
    %p136 = por %p134, %p135
    %p137 = scmp.ne.s32.totalorder %s126, %s127
    %p138 = scmp.eq.s32.totalorder %s16, 0
    %p139 = por %p137, %p138
    %p140 = scmp.ne.s32.totalorder %s126, %s127
    %p141 = scmp.eq.s32.totalorder %s17, 1
    %p142 = por %p140, %p141
    %p144 = scmp.ne.s32.totalorder %s127, %s143
    %p145 = scmp.eq.s32.totalorder %s17, 0
    %p146 = por %p144, %p145
    %s147 = ssub.s32 %s18, %s30
    %p148 = scmp.eq.s32.totalorder %s147, 0
    %s150 = sadd.s32 %s149, 1
    %s151 = scalar_select %p148, %s149, %s150
    %p154 = pneg %p148
    %p155 = scmp.eq.s32.totalorder %s11, 1
    %p156 = por %p154, %p155
    %p157 = scmp.ne.s32.totalorder %s149, %s152
    %p158 = scmp.eq.s32.totalorder %s11, 0
    %p159 = por %p157, %p158
    %p160 = scmp.ne.s32.totalorder %s149, %s152
    %p161 = scmp.eq.s32.totalorder %s16, 1
    %p162 = por %p160, %p161
    %p163 = scmp.ne.s32.totalorder %s152, %s153
    %p164 = scmp.eq.s32.totalorder %s16, 0
    %p165 = por %p163, %p164
    %p166 = scmp.ne.s32.totalorder %s152, %s153
    %p167 = scmp.eq.s32.totalorder %s17, 1
    %p168 = por %p166, %p167
    %p170 = scmp.ne.s32.totalorder %s153, %s169
    %p171 = scmp.eq.s32.totalorder %s17, 0
    %p172 = por %p170, %p171
    %p173 = scmp.le.s32.totalorder 1, %s11
    %p174 = scmp.lt.s32.totalorder %s11, 3
    %p175 = pnand %p173, %p174
    %p176 = pneg %p175
    // Predicated region
    $region9: #{dice_loss.1} parent=5 // pred_check
      _
    $region10: #{dice_loss.1} parent=5 // pred_check_branch
      %178 = sbr.rel (%p175) target = $region12
    $region11: #{dice_loss.1} parent=5 // pred_region
      %s179 = ssub.s32 %s11, 1
    $region12: #{dice_loss.1} parent=5 // pred_fallthru
      _
    %p180 = scmp.lt.s32.totalorder %s11, 2
    // Predicated region
    $region13: #{dice_loss.1} parent=5 // pred_check
      %p181 = pneg %p180
    $region14: #{dice_loss.1} parent=5 // pred_check_branch
      %183 = sbr.rel (%p181) target = $region16
    $region15: #{dice_loss.1} parent=5 // pred_region
      // Predicated region
      $region17: #{dice_loss.1} parent=15 // pred_check
        %p184 = pneg %p49
      $region18: #{dice_loss.1} parent=15 // pred_check_branch
        %186 = sbr.rel (%p184) target = $region20
      $region19: #{dice_loss.1} parent=15 // pred_region
        %s187 = sadd.s32 %s18, %s19
        %p188 = scmp.lt.s32.totalorder %s187, 0
        %s189 = scalar_select %p188, %s187, 0
        %s190 = smul.u32 4, %s189
        %s191 = ssub.s32 2, %s190
        %s192 = smul.u32 128, %s191
        %p193 = scmp.lt.s32.totalorder %s190, 1
        %s194 = scalar_select %p193, %s190, 1
        %s195 = smul.addr %s194, 8
        %s196 = scalar_lea.vmem %s0, %s195
        %s197 = sadd.s32 %s18, %s19
        %p198 = scmp.lt.s32.totalorder %s197, 0
        %s199 = scalar_select %p198, %s197, 0
        %s200 = smul.u32 4, %s199
        %s201 = ssub.s32 2, %s200
        %s202 = smul.u32 128, %s201
      $region20: #{dice_loss.1} parent=15 // pred_fallthru
        _
      // Predicated region
      $region21: #{dice_loss.1} parent=15 // pred_check
        %p203 = pneg %p81
      $region22: #{dice_loss.1} parent=15 // pred_check_branch
        %205 = sbr.rel (%p203) target = $region24
      $region23: #{dice_loss.1} parent=15 // pred_region
        %s206 = sadd.s32 %s18, %s19
        %p207 = scmp.lt.s32.totalorder %s206, 0
        %s208 = scalar_select %p207, %s206, 0
        %s209 = smul.u32 4, %s208
        %s210 = ssub.s32 2, %s209
        %s211 = smul.u32 128, %s210
        %p212 = scmp.lt.s32.totalorder %s209, 1
        %s213 = scalar_select %p212, %s209, 1
        %s214 = smul.addr %s213, 8
        %s215 = scalar_lea.vmem %s1, %s214
        %s216 = sadd.s32 %s18, %s19
        %p217 = scmp.lt.s32.totalorder %s216, 0
        %s218 = scalar_select %p217, %s216, 0
        %s219 = smul.u32 4, %s218
        %s220 = ssub.s32 2, %s219
        %s221 = smul.u32 128, %s220
      $region24: #{dice_loss.1} parent=15 // pred_fallthru
        _
    $region16: #{dice_loss.1} parent=5 // pred_fallthru
      _
    %p222 = scmp.le.s32.totalorder 1, %s11
    %p223 = scmp.lt.s32.totalorder %s11, 3
    %p224 = pnand %p222, %p223
    %p225 = pneg %p224
    // Predicated region
    $region25: #{dice_loss.1} parent=5 // pred_check
      _
    $region26: #{dice_loss.1} parent=5 // pred_check_branch
      %227 = sbr.rel (%p224) target = $region28
    $region27: #{dice_loss.1} parent=5 // pred_region
      %s228 = ssub.s32 %s11, 1
      %s229 = sadd.s32 %s20, %s21
      %p230 = scmp.lt.s32.totalorder %s229, 0
      %s231 = scalar_select %p230, %s229, 0
      %s232 = smul.u32 4, %s231
      %s233 = ssub.s32 2, %s232
      %s234 = smul.u32 128, %s233
      %p235 = scmp.lt.s32.totalorder %s232, 1
      %s236 = scalar_select %p235, %s232, 1
      %s237 = smul.addr %s236, 8
      %s238 = scalar_lea.vmem %s0, %s237
      %p239 = pneg %p55
      %p240 = pneg %p52
      %s241 = sadd.s32 %s20, %s21
      %p242 = scmp.lt.s32.totalorder %s241, 0
      %s243 = scalar_select %p242, %s241, 0
      %s244 = smul.u32 4, %s243
      %s245 = ssub.s32 2, %s244
      %s246 = smul.u32 128, %s245
      %p247 = scmp.lt.s32.totalorder %s244, 1
      %s248 = scalar_select %p247, %s244, 1
      %s249 = smul.addr %s248, 8
      %s250 = scalar_lea.vmem %s1, %s249
      %p251 = pneg %p87
      %p252 = pneg %p84
      %p253 = pneg %p113
      %p254 = pneg %p110
      %p255 = scmp.lt.s32.totalorder %s20, 1
      %s256 = scalar_select %p255, %s20, 1
      %s257 = smul.addr %s256, 8
      %s258 = scalar_lea.vmem %s2, %s257
      %p259 = pneg %p139
      %p260 = pneg %p136
      %p261 = scmp.lt.s32.totalorder %s20, 1
      %s262 = scalar_select %p261, %s20, 1
      %s263 = smul.addr %s262, 8
      %s264 = scalar_lea.vmem %s3, %s263
      %p265 = pneg %p165
      %p266 = pneg %p162
      %p267 = scmp.lt.s32.totalorder %s20, 1
      %s268 = scalar_select %p267, %s20, 1
      %s269 = smul.addr %s268, 8
      %s270 = scalar_lea.vmem %s4, %s269
      %s271 = sadd.s32 %s20, %s21
      %p272 = scmp.lt.s32.totalorder %s271, 0
      %s273 = scalar_select %p272, %s271, 0
      %s274 = smul.u32 4, %s273
      %s275 = ssub.s32 2, %s274
      %s276 = smul.u32 128, %s275
      %p277 = scmp.lt.s32.totalorder %s274, 1
      %s278 = scalar_select %p277, %s274, 1
      %s279 = smul.addr %s278, 8
      %s280 = scalar_lea.vmem %s0, %s279
      %s281 = sadd.s32 %s20, %s21
      %p282 = scmp.lt.s32.totalorder %s281, 0
      %s283 = scalar_select %p282, %s281, 0
      %s284 = smul.u32 4, %s283
      %s285 = ssub.s32 2, %s284
      %s286 = smul.u32 128, %s285
      %s287 = sadd.s32 %s20, %s21
      %p288 = scmp.lt.s32.totalorder %s287, 0
      %s289 = scalar_select %p288, %s287, 0
      %s290 = smul.u32 4, %s289
      %s291 = ssub.s32 2, %s290
      %s292 = smul.u32 128, %s291
      %p293 = scmp.lt.s32.totalorder %s290, 1
      %s294 = scalar_select %p293, %s290, 1
      %s295 = smul.addr %s294, 8
      %s296 = scalar_lea.vmem %s1, %s295
      %s297 = sadd.s32 %s20, %s21
      %p298 = scmp.lt.s32.totalorder %s297, 0
      %s299 = scalar_select %p298, %s297, 0
      %s300 = smul.u32 4, %s299
      %s301 = ssub.s32 2, %s300
      %s302 = smul.u32 128, %s301
      %p303 = scmp.lt.s32.totalorder %s20, 1
      %s304 = scalar_select %p303, %s20, 1
      %s305 = smul.addr %s304, 8
      %s306 = scalar_lea.vmem %s2, %s305
      %p307 = scmp.lt.s32.totalorder %s20, 1
      %s308 = scalar_select %p307, %s20, 1
      %s309 = smul.addr %s308, 8
      %s310 = scalar_lea.vmem %s3, %s309
      %p311 = scmp.lt.s32.totalorder %s20, 1
      %s312 = scalar_select %p311, %s20, 1
      %s313 = smul.addr %s312, 8
      %s314 = scalar_lea.vmem %s4, %s313
      %p315 = scmp.eq.s32.totalorder %s21, 0
      // Predicated region
      $region29: #{dice_loss.1} parent=27 // pred_check
        %p316 = pneg %p315
      $region30: #{dice_loss.1} parent=27 // pred_check_branch
        %318 = sbr.rel (%p316) target = $region32
      $region31: #{dice_loss.1} parent=27 // pred_region
        %319 = vst [vmem:[%s306] sm:$0xff] 0.0
        %320 = vst [vmem:[%s310] sm:$0xff] 0.0
        %321 = vst [vmem:[%s314] sm:$0xff] 0.0
      $region32: #{dice_loss.1} parent=27 // pred_fallthru
        _
      %s322 = sadd.s32 %s20, %s21
      %s323 = smul.u32 %s322, 32
      %s324 = sadd.s32 %s323, 32
      %p325 = scmp.gt.s32.totalorder %s324, 16
      %p326 = scmp.le.s32.totalorder %s324, 16
      // Predicated region
      $region33: #{dice_loss.1} parent=27 // pred_check
        %p327 = pneg %p326
      $region34: #{dice_loss.1} parent=27 // pred_check_branch
        %329 = sbr.rel (%p327) target = $region36
      $region35: #{dice_loss.1} parent=27 // pred_region
        %v330 = vld [vmem:[%s280] sm:$0xff]
        %v331 = vld [vmem:[%s280 + $0x8] sm:$0xff]
        %v332 = vld [vmem:[%s280 + $0x10] sm:$0xff]
        %v333 = vld [vmem:[%s280 + $0x18] sm:$0xff]
        %v334 = vld [vmem:[%s296] sm:$0xff]
        %v335 = vld [vmem:[%s296 + $0x8] sm:$0xff]
        %v336 = vld [vmem:[%s296 + $0x10] sm:$0xff]
        %v337 = vld [vmem:[%s296 + $0x18] sm:$0xff]
        %v338 = vmul.f32 %v330, 0.5
        %v339 = vmul.f32 %v331, 0.5
        %v340 = vmul.f32 %v332, 0.5
        %v341 = vmul.f32 %v333, 0.5
        %v342 = vtanh.pop %v338
        %v343 = vtanh.pop %v339
        %v344 = vtanh.pop %v340
        %v345 = vtanh.pop %v341
        %v346 = vmul.f32 %v342, 0.5
        %v347 = vmul.f32 %v343, 0.5
        %v348 = vmul.f32 %v344, 0.5
        %v349 = vmul.f32 %v345, 0.5
        %v350 = vadd.f32 %v346, 0.5
        %v351 = vadd.f32 %v347, 0.5
        %v352 = vadd.f32 %v348, 0.5
        %v353 = vadd.f32 %v349, 0.5
        %v354 = vmul.f32 %v350, 0.5
        %v355 = vmul.f32 %v351, 0.5
        %v356 = vmul.f32 %v352, 0.5
        %v357 = vmul.f32 %v353, 0.5
        %v358 = vtanh.pop %v354
        %v359 = vtanh.pop %v355
        %v360 = vtanh.pop %v356
        %v361 = vtanh.pop %v357
        %v362 = vmul.f32 %v358, 0.5
        %v363 = vmul.f32 %v359, 0.5
        %v364 = vmul.f32 %v360, 0.5
        %v365 = vmul.f32 %v361, 0.5
        %v366 = vadd.f32 %v362, 0.5
        %v367 = vadd.f32 %v363, 0.5
        %v368 = vadd.f32 %v364, 0.5
        %v369 = vadd.f32 %v365, 0.5
        %v370 = vld [vmem:[%s306] sm:$0xff]
        %v371 = vmul.f32 %v366, %v334
        %v372 = vmul.f32 %v367, %v335
        %v373 = vmul.f32 %v368, %v336
        %v374 = vmul.f32 %v369, %v337
        %v375 = vadd.f32 %v371, %v372
        %v376 = vadd.f32 %v375, %v373
        %v377 = vadd.f32 %v376, %v374
        %v378 = vadd.f32 %v370, %v377
        %379 = vst [vmem:[%s306] sm:$0xff] %v378
        %v380 = vld [vmem:[%s310] sm:$0xff]
        %v381 = vadd.f32 %v366, %v367
        %v382 = vadd.f32 %v381, %v368
        %v383 = vadd.f32 %v382, %v369
        %v384 = vadd.f32 %v380, %v383
        %385 = vst [vmem:[%s310] sm:$0xff] %v384
        %v386 = vld [vmem:[%s314] sm:$0xff]
        %v387 = vadd.f32 %v334, %v335
        %v388 = vadd.f32 %v387, %v336
        %v389 = vadd.f32 %v388, %v337
        %v390 = vadd.f32 %v386, %v389
        %391 = vst [vmem:[%s314] sm:$0xff] %v390
      $region36: #{dice_loss.1} parent=27 // pred_fallthru
        _
      // Predicated region
      $region37: #{dice_loss.1} parent=27 // pred_check
        %p392 = pneg %p325
      $region38: #{dice_loss.1} parent=27 // pred_check_branch
        %394 = sbr.rel (%p392) target = $region40
      $region39: #{dice_loss.1} parent=27 // pred_region
        %v395 = vlaneseq
        %v396 = vshrl.u32 %v395, 7
        %v397 = vadd.s32 %v396, 8
        %v398 = vadd.s32 %v396, 16
        %v399 = vadd.s32 %v396, 24
        %v400 = vstv %s323
        %v401 = vadd.s32 %v400, %v396
        %v402 = vadd.s32 %v400, %v397
        %v403 = vadd.s32 %v400, %v398
        %v404 = vadd.s32 %v400, %v399
        %vm405 = vcmp.lt.s32.totalorder %v401, 16
        %vm406 = vcmp.lt.s32.totalorder %v402, 16
        %vm407 = vcmp.lt.s32.totalorder %v403, 16
        %vm408 = vcmp.lt.s32.totalorder %v404, 16
        %v409 = vld [vmem:[%s280] sm:$0xff]
        %v410 = vld [vmem:[%s280 + $0x8] sm:$0xff]
        %v411 = vld [vmem:[%s280 + $0x10] sm:$0xff]
        %v412 = vld [vmem:[%s280 + $0x18] sm:$0xff]
        %v413 = vld [vmem:[%s296] sm:$0xff]
        %v414 = vld [vmem:[%s296 + $0x8] sm:$0xff]
        %v415 = vld [vmem:[%s296 + $0x10] sm:$0xff]
        %v416 = vld [vmem:[%s296 + $0x18] sm:$0xff]
        %v417 = vsel %vm405, %v413, 0.0
        %v418 = vsel %vm406, %v414, 0.0
        %v419 = vsel %vm407, %v415, 0.0
        %v420 = vsel %vm408, %v416, 0.0
        %v421 = vmul.f32 %v409, 0.5
        %v422 = vmul.f32 %v410, 0.5
        %v423 = vmul.f32 %v411, 0.5
        %v424 = vmul.f32 %v412, 0.5
        %v425 = vtanh.pop %v421
        %v426 = vtanh.pop %v422
        %v427 = vtanh.pop %v423
        %v428 = vtanh.pop %v424
        %v429 = vmul.f32 %v425, 0.5
        %v430 = vmul.f32 %v426, 0.5
        %v431 = vmul.f32 %v427, 0.5
        %v432 = vmul.f32 %v428, 0.5
        %v433 = vadd.f32 %v429, 0.5
        %v434 = vadd.f32 %v430, 0.5
        %v435 = vadd.f32 %v431, 0.5
        %v436 = vadd.f32 %v432, 0.5
        %v437 = vmul.f32 %v433, 0.5
        %v438 = vmul.f32 %v434, 0.5
        %v439 = vmul.f32 %v435, 0.5
        %v440 = vmul.f32 %v436, 0.5
        %v441 = vtanh.pop %v437
        %v442 = vtanh.pop %v438
        %v443 = vtanh.pop %v439
        %v444 = vtanh.pop %v440
        %v445 = vmul.f32 %v441, 0.5
        %v446 = vmul.f32 %v442, 0.5
        %v447 = vmul.f32 %v443, 0.5
        %v448 = vmul.f32 %v444, 0.5
        %v449 = vadd.f32 %v445, 0.5
        %v450 = vadd.f32 %v446, 0.5
        %v451 = vadd.f32 %v447, 0.5
        %v452 = vadd.f32 %v448, 0.5
        %v453 = vsel %vm405, %v449, 0.0
        %v454 = vsel %vm406, %v450, 0.0
        %v455 = vsel %vm407, %v451, 0.0
        %v456 = vsel %vm408, %v452, 0.0
        %v457 = vld [vmem:[%s306] sm:$0xff]
        %v458 = vmul.f32 %v453, %v417
        %v459 = vmul.f32 %v454, %v418
        %v460 = vmul.f32 %v455, %v419
        %v461 = vmul.f32 %v456, %v420
        %v462 = vadd.f32 %v458, %v459
        %v463 = vadd.f32 %v462, %v460
        %v464 = vadd.f32 %v463, %v461
        %v465 = vadd.f32 %v457, %v464
        %466 = vst [vmem:[%s306] sm:$0xff] %v465
        %v467 = vld [vmem:[%s310] sm:$0xff]
        %v468 = vadd.f32 %v453, %v454
        %v469 = vadd.f32 %v468, %v455
        %v470 = vadd.f32 %v469, %v456
        %v471 = vadd.f32 %v467, %v470
        %472 = vst [vmem:[%s310] sm:$0xff] %v471
        %v473 = vld [vmem:[%s314] sm:$0xff]
        %v474 = vadd.f32 %v417, %v418
        %v475 = vadd.f32 %v474, %v419
        %v476 = vadd.f32 %v475, %v420
        %v477 = vadd.f32 %v473, %v476
        %478 = vst [vmem:[%s314] sm:$0xff] %v477
      $region40: #{dice_loss.1} parent=27 // pred_fallthru
        _
      %p479 = scmp.lt.s32.totalorder %s20, 1
      %s480 = scalar_select %p479, %s20, 1
      %s481 = smul.addr %s480, 8
      %s482 = scalar_lea.vmem %s2, %s481
      %p483 = scmp.lt.s32.totalorder %s20, 1
      %s484 = scalar_select %p483, %s20, 1
      %s485 = smul.addr %s484, 8
      %s486 = scalar_lea.vmem %s3, %s485
      %p487 = scmp.lt.s32.totalorder %s20, 1
      %s488 = scalar_select %p487, %s20, 1
      %s489 = smul.addr %s488, 8
      %s490 = scalar_lea.vmem %s4, %s489
      // Predicated region
      $region41: #{dice_loss.1} parent=27 // pred_check
        %p491 = pneg %p110
      $region42: #{dice_loss.1} parent=27 // pred_check_branch
        %493 = sbr.rel (%p491) target = $region44
      $region43: #{dice_loss.1} parent=27 // pred_region
        _
      $region44: #{dice_loss.1} parent=27 // pred_fallthru
        _
      // Predicated region
      $region45: #{dice_loss.1} parent=27 // pred_check
        %p494 = pneg %p136
      $region46: #{dice_loss.1} parent=27 // pred_check_branch
        %496 = sbr.rel (%p494) target = $region48
      $region47: #{dice_loss.1} parent=27 // pred_region
        _
      $region48: #{dice_loss.1} parent=27 // pred_fallthru
        _
      // Predicated region
      $region49: #{dice_loss.1} parent=27 // pred_check
        %p497 = pneg %p162
      $region50: #{dice_loss.1} parent=27 // pred_check_branch
        %499 = sbr.rel (%p497) target = $region52
      $region51: #{dice_loss.1} parent=27 // pred_region
        _
      $region52: #{dice_loss.1} parent=27 // pred_fallthru
        _
    $region28: #{dice_loss.1} parent=5 // pred_fallthru
      _
    %p500 = scmp.le.s32.totalorder 2, %s11
    // Predicated region
    $region53: #{dice_loss.1} parent=5 // pred_check
      %p501 = pneg %p500
    $region54: #{dice_loss.1} parent=5 // pred_check_branch
      %503 = sbr.rel (%p501) target = $region56
    $region55: #{dice_loss.1} parent=5 // pred_region
      %s504 = ssub.s32 %s11, 2
      // Predicated region
      $region57: #{dice_loss.1} parent=55 // pred_check
        %p505 = pneg %p116
      $region58: #{dice_loss.1} parent=55 // pred_check_branch
        %507 = sbr.rel (%p505) target = $region60
      $region59: #{dice_loss.1} parent=55 // pred_region
        %p508 = scmp.lt.s32.totalorder %s22, 1
        %s509 = scalar_select %p508, %s22, 1
        %s510 = smul.addr %s509, 8
        %s511 = scalar_lea.vmem %s2, %s510
      $region60: #{dice_loss.1} parent=55 // pred_fallthru
        _
      // Predicated region
      $region61: #{dice_loss.1} parent=55 // pred_check
        %p512 = pneg %p142
      $region62: #{dice_loss.1} parent=55 // pred_check_branch
        %514 = sbr.rel (%p512) target = $region64
      $region63: #{dice_loss.1} parent=55 // pred_region
        %p515 = scmp.lt.s32.totalorder %s22, 1
        %s516 = scalar_select %p515, %s22, 1
        %s517 = smul.addr %s516, 8
        %s518 = scalar_lea.vmem %s3, %s517
      $region64: #{dice_loss.1} parent=55 // pred_fallthru
        _
      // Predicated region
      $region65: #{dice_loss.1} parent=55 // pred_check
        %p519 = pneg %p168
      $region66: #{dice_loss.1} parent=55 // pred_check_branch
        %521 = sbr.rel (%p519) target = $region68
      $region67: #{dice_loss.1} parent=55 // pred_region
        %p522 = scmp.lt.s32.totalorder %s22, 1
        %s523 = scalar_select %p522, %s22, 1
        %s524 = smul.addr %s523, 8
        %s525 = scalar_lea.vmem %s4, %s524
      $region68: #{dice_loss.1} parent=55 // pred_fallthru
        _
    $region56: #{dice_loss.1} parent=5 // pred_fallthru
      _
  $region6: #{dice_loss.1} parent=0 // loop_footer
    %s15 = sadd.s32 1, %s11
  $region7: #{dice_loss.1} parent=0 // loop_footer_branch
    %10 = sbr.rel target = $region3
  $region8: #{dice_loss.1} parent=0 // loop_exit
    _

</llo_original>
